<compile_context>
chip_gen: v7x
topology: tpu7x:2x2x1
jax: 0.10.0
libtpu: 0.0.40
codegen_flags: <defaults>
</compile_context>

<pallas_src>
import jax
import jax.numpy as jnp
from jax.experimental import pallas as pl
from jax.experimental.pallas import tpu as pltpu


def _round_up(v, m):
    return ((v + m - 1) // m) * m


def _cdiv(a, b):
    return (a + b - 1) // b


def _make_kernel(hw, thw, needs_hw_mask):
    """Grid = (batch_tiles, hw_chunks); hw is the (arbitrary) reduction axis.

    x_ref  : (TB, C, thw)  float32    image tile, NCHW flattened over spatial
    ws_ref : (C, HID)      float32    stand-in backbone proj (mean scale folded in)
    bs_ref : (1, HID)      float32
    wl_ref : (HID, F)      float32    Linear weight, pre-transposed (x @ wl)
    bl_ref : (1, F)        float32    Linear bias
    o_ref  : (TB, F)       float32    L2-normalized query
    acc_ref: (TB, C)       float32    VMEM scratch: running spatial sum
    """

    def memnet_fwd_kernel(x_ref, ws_ref, bs_ref, wl_ref, bl_ref, o_ref, acc_ref):
        hw_i = pl.program_id(1)

        @pl.when(hw_i == 0)
        def _():
            acc_ref[...] = jnp.zeros_like(acc_ref)

        # ---- accumulate spatial sum in f32 (x streamed straight from HBM) ----
        x = x_ref[...]                                  # (TB, C, thw)
        if needs_hw_mask:
            # zero out the overhanging tail columns of the last hw chunk so the
            # pooled sum of *valid* rows is exact (no host-side padding of x).
            col = jax.lax.broadcasted_iota(jnp.int32, x.shape, 2)
            valid = hw - hw_i * thw                     # remaining valid cols
            x = jnp.where(col < valid, x, 0.0)
        acc_ref[...] += jnp.sum(x, axis=2)

        @pl.when(hw_i == pl.num_programs(1) - 1)
        def _():
            pooled = acc_ref[...]                       # (TB, C); 1/HW in ws

            # --- stand-in ResNet18: dense(C->512) + ReLU ----------------------
            feat = jnp.dot(pooled, ws_ref[...],
                           preferred_element_type=jnp.float32) + bs_ref[...]
            feat = jnp.maximum(feat, 0.0)               # (TB, HID)

            # --- Linear(512, spatial_feat_dim) --------------------------------
            q = jnp.dot(feat, wl_ref[...],
                        preferred_element_type=jnp.float32) + bl_ref[...]

            # --- F.normalize(q, dim=1): q / max(||q||, 1e-12) ------------------
            # rsqrt runs on the EUP slot; equivalent to the PyTorch clamp for
            # all normal f32 norms (only sub-~1e-12 norms differ).
            norm_sq = jnp.sum(q * q, axis=1, keepdims=True)
            q = q * jax.lax.rsqrt(jnp.maximum(norm_sq, 1e-24))

            o_ref[...] = q

    return memnet_fwd_kernel


def memory_network_forward(x_nchw, w_stem, b_stem, w_lin, b_lin):
    """x_nchw: (B, C, H, W) float32 -> (B, spatial_feat_dim) float32."""
    B, C, H, W = x_nchw.shape
    HID = w_stem.shape[1]
    F = w_lin.shape[1]
    hw = H * W

    # ---- tile sizing (budget uses the *padded* block: f32 pads C to 8) ------
    C_pad = _round_up(C, 8)
    BUF_TARGET = 8 * 1024 * 1024                 # bytes per x buffer (>=4 MiB sweet spot)

    if B >= 16:
        # v7x: guarantee at least 2 batch tiles so the parallel axis shards
        # across both TensorCores (harmless on single-TC v5e/v6e).
        TB = min(256, _round_up(_cdiv(B, 2), 8))
    else:
        TB = _round_up(B, 8)
    # large-C guard: shrink TB before the thw=128 floor can blow the budget
    max_tb_for_c = max(8, ((BUF_TARGET // (C_pad * 128 * 4)) // 8) * 8)
    TB = max(8, min(TB, max_tb_for_c))

    nb = _cdiv(B, TB)

    thw_budget = BUF_TARGET // (TB * C_pad * 4)
    thw = max(128, (thw_budget // 128) * 128)
    thw = min(thw, _round_up(hw, 128))
    n_hw = _cdiv(hw, thw)
    needs_hw_mask = (hw % thw) != 0

    # ---- host-side prep (metadata only on the big operand) -------------------
    x3 = x_nchw.reshape(B, C, hw)                              # free view
    ws = (w_stem / jnp.float32(hw)).astype(jnp.float32)        # fold 1/(H*W), tiny

    x_block_bytes = TB * C_pad * thw * 4
    vmem_limit = int(min(64 * 1024 * 1024,
                         max(32 * 1024 * 1024, 2 * x_block_bytes + (8 << 20))))

    out = pl.pallas_call(
        _make_kernel(hw, thw, needs_hw_mask),
        out_shape=jax.ShapeDtypeStruct((nb * TB, F), jnp.float32),
        grid_spec=pltpu.PrefetchScalarGridSpec(
            num_scalar_prefetch=0,
            grid=(nb, n_hw),
            in_specs=[
                # big operand: tiled over (batch, hw); overhanging tail blocks
                # are masked in-kernel (hw) / confined to discarded rows (batch)
                pl.BlockSpec((TB, C, thw), lambda i, h: (i, 0, h)),
                # small weights/biases: constant index_map -> resident in VMEM
                pl.BlockSpec((C, HID), lambda i, h: (0, 0)),
                pl.BlockSpec((1, HID), lambda i, h: (0, 0)),
                pl.BlockSpec((HID, F), lambda i, h: (0, 0)),
                pl.BlockSpec((1, F), lambda i, h: (0, 0)),
            ],
            out_specs=pl.BlockSpec((TB, F), lambda i, h: (i, 0)),
            scratch_shapes=[pltpu.VMEM((TB, C), jnp.float32)],
        ),
        compiler_params=pltpu.CompilerParams(
            dimension_semantics=("parallel", "arbitrary"),
            vmem_limit_bytes=vmem_limit,
        ),
    )(x3, ws, b_stem.astype(jnp.float32), w_lin.astype(jnp.float32),
      b_lin.astype(jnp.float32))

    return out[:B]


def init_params(key, in_channels, hidden=512, spatial_feat_dim=128):
    """Deterministic parameter init (synthetic; no checkpoint loading)."""
    k1, k2, k3, k4 = jax.random.split(key, 4)
    # stand-in backbone projection: C -> 512
    w_stem = jax.random.uniform(k1, (in_channels, hidden),
                                minval=-0.1, maxval=0.1, dtype=jnp.float32)
    b_stem = jax.random.uniform(k2, (1, hidden),
                                minval=-0.1, maxval=0.1, dtype=jnp.float32)
    # nn.Linear(512, spatial_feat_dim): stored as (512, F) so kernel does x @ W
    bound = 1.0 / jnp.sqrt(hidden)
    w_lin = jax.random.uniform(k3, (hidden, spatial_feat_dim),
                               minval=-bound, maxval=bound, dtype=jnp.float32)
    b_lin = jax.random.uniform(k4, (1, spatial_feat_dim),
                               minval=-bound, maxval=bound, dtype=jnp.float32)
    return w_stem, b_stem, w_lin, b_lin


def reference_forward(x_nchw, w_stem, b_stem, w_lin, b_lin):
    """Pure-JAX reference matching the kernel's numerics (all f32)."""
    B, C, H, W = x_nchw.shape
    hw = H * W
    pooled = jnp.sum(x_nchw.reshape(B, C, hw), axis=2)         # spatial SUM
    feat = jnp.maximum(pooled @ (w_stem / jnp.float32(hw)) + b_stem, 0.0)
    q = feat @ w_lin + b_lin
    norm = jnp.sqrt(jnp.sum(q * q, axis=1, keepdims=True))
    return q / jnp.maximum(norm, 1e-12)


if __name__ == "__main__":
    # small synthetic shapes: batch=2, channels=4, spatial=16x16,
    # backbone feature dim=512 (fixed by the module), spatial_feat_dim=128
    B, C, H, W = 2, 4, 16, 16
    SPATIAL_FEAT_DIM = 128

    key = jax.random.PRNGKey(0)
    kx, kp = jax.random.split(key)
    x = jax.random.normal(kx, (B, C, H, W), dtype=jnp.float32)
    w_stem, b_stem, w_lin, b_lin = init_params(
        kp, in_channels=C, hidden=512, spatial_feat_dim=SPATIAL_FEAT_DIM)

    fwd = jax.jit(memory_network_forward)
    q = jax.block_until_ready(fwd(x, w_stem, b_stem, w_lin, b_lin))

    # sanity check against pure-JAX reference
    q_ref = reference_forward(x, w_stem, b_stem, w_lin, b_lin)
    assert q.shape == (B, SPATIAL_FEAT_DIM)
    assert jnp.allclose(q, q_ref, atol=1e-3, rtol=1e-3), "mismatch vs reference"
    # rows should be unit-norm
    assert jnp.allclose(jnp.linalg.norm(q, axis=1), 1.0, atol=1e-3)

    print("KERNEL_OK")
</pallas_src>

<mosaic_0001>
module attributes {stable_mosaic.version = 11 : i64} {
  func.func @memnet_fwd_kernel(%arg0: i32, %arg1: i32, %arg2: memref<8x4x256xf32, #tpu.memory_space<vmem>>, %arg3: memref<4x512xf32, #tpu.memory_space<vmem>>, %arg4: memref<1x512xf32, #tpu.memory_space<vmem>>, %arg5: memref<512x128xf32, #tpu.memory_space<vmem>>, %arg6: memref<1x128xf32, #tpu.memory_space<vmem>>, %arg7: memref<8x128xf32, #tpu.memory_space<vmem>>, %arg8: memref<8x4xf32, #tpu.memory_space<vmem>>) attributes {dimension_semantics = [#tpu.dimension_semantics<parallel>, #tpu.dimension_semantics<arbitrary>], iteration_bounds = array<i64: 1, 1>, scalar_prefetch = 0 : i64, scratch_operands = 1 : i64, tpu.core_type = #tpu.core_type<tc>, window_params = [{transform_indices = @transform_0, window_bounds = array<i64: 8, 4, 256>}, {pipeline_mode = #tpu.pipeline_mode<synchronous>, transform_indices = @transform_1, window_bounds = array<i64: 4, 512>}, {pipeline_mode = #tpu.pipeline_mode<synchronous>, transform_indices = @transform_2, window_bounds = array<i64: 1, 512>}, {pipeline_mode = #tpu.pipeline_mode<synchronous>, transform_indices = @transform_3, window_bounds = array<i64: 512, 128>}, {pipeline_mode = #tpu.pipeline_mode<synchronous>, transform_indices = @transform_4, window_bounds = array<i64: 1, 128>}, {transform_indices = @transform_5, window_bounds = array<i64: 8, 128>}]} {
    %c0_i32 = arith.constant 0 : i32
    %0 = arith.cmpi eq, %arg1, %c0_i32 : i32
    %1 = arith.extui %0 : i1 to i32
    %c0_i32_0 = arith.constant 0 : i32
    %2 = arith.cmpi ne, %1, %c0_i32_0 : i32
    scf.if %2 {
      %cst_9 = arith.constant 0.000000e+00 : f32
      %11 = vector.broadcast %cst_9 : f32 to vector<8x4xf32>
      %c0_10 = arith.constant 0 : index
      %c0_11 = arith.constant 0 : index
      %12 = vector.load %arg8[%c0_10, %c0_11] : memref<8x4xf32, #tpu.memory_space<vmem>>, vector<8x4xf32>
      tpu.vector_store %arg8[%c0_10, %c0_11], %11 {strides = array<i32>} : memref<8x4xf32, #tpu.memory_space<vmem>>, vector<8x4xf32>,
    } else {
    }
    %c0 = arith.constant 0 : index
    %c0_1 = arith.constant 0 : index
    %c0_2 = arith.constant 0 : index
    %3 = vector.load %arg2[%c0, %c0_1, %c0_2] : memref<8x4x256xf32, #tpu.memory_space<vmem>>, vector<8x4x256xf32>
    %c0_3 = arith.constant 0 : index
    %c0_4 = arith.constant 0 : index
    %4 = vector.load %arg8[%c0_3, %c0_4] : memref<8x4xf32, #tpu.memory_space<vmem>>, vector<8x4xf32>
    %cst = arith.constant dense<0.000000e+00> : vector<8x4xf32>
    %5 = vector.multi_reduction <add>, %3, %cst [2] : vector<8x4x256xf32> to vector<8x4xf32>
    %6 = arith.addf %4, %5 : vector<8x4xf32>
    %c0_5 = arith.constant 0 : index
    %c0_6 = arith.constant 0 : index
    %7 = vector.load %arg8[%c0_5, %c0_6] : memref<8x4xf32, #tpu.memory_space<vmem>>, vector<8x4xf32>
    tpu.vector_store %arg8[%c0_5, %c0_6], %6 {strides = array<i32>} : memref<8x4xf32, #tpu.memory_space<vmem>>, vector<8x4xf32>,
    %c0_i32_7 = arith.constant 0 : i32
    %8 = arith.cmpi eq, %arg1, %c0_i32_7 : i32
    %9 = arith.extui %8 : i1 to i32
    %c0_i32_8 = arith.constant 0 : i32
    %10 = arith.cmpi ne, %9, %c0_i32_8 : i32
    scf.if %10 {
      %c0_9 = arith.constant 0 : index
      %c0_10 = arith.constant 0 : index
      %11 = vector.load %arg8[%c0_9, %c0_10] : memref<8x4xf32, #tpu.memory_space<vmem>>, vector<8x4xf32>
      %c0_11 = arith.constant 0 : index
      %c0_12 = arith.constant 0 : index
      %12 = vector.load %arg3[%c0_11, %c0_12] : memref<4x512xf32, #tpu.memory_space<vmem>>, vector<4x512xf32>
      %cst_13 = arith.constant dense<0.000000e+00> : vector<8x512xf32>
      %13 = tpu.matmul %11, %12, %cst_13 {dimension_numbers = #tpu.dot_dimension_numbers<[1], [0], [0], [1], [0, 0, 1, 1], [], []>} : vector<8x4xf32>, vector<4x512xf32>, vector<8x512xf32> -> vector<8x512xf32>
      %c0_14 = arith.constant 0 : index
      %c0_15 = arith.constant 0 : index
      %14 = vector.load %arg4[%c0_14, %c0_15] : memref<1x512xf32, #tpu.memory_space<vmem>>, vector<1x512xf32>
      %15 = vector.broadcast %14 : vector<1x512xf32> to vector<8x512xf32>
      %16 = arith.addf %13, %15 : vector<8x512xf32>
      %cst_16 = arith.constant 0.000000e+00 : f32
      %17 = vector.broadcast %cst_16 : f32 to vector<8x512xf32>
      %18 = arith.maximumf %16, %17 : vector<8x512xf32>
      %c0_17 = arith.constant 0 : index
      %c0_18 = arith.constant 0 : index
      %19 = vector.load %arg5[%c0_17, %c0_18] : memref<512x128xf32, #tpu.memory_space<vmem>>, vector<512x128xf32>
      %cst_19 = arith.constant dense<0.000000e+00> : vector<8x128xf32>
      %20 = tpu.matmul %18, %19, %cst_19 {dimension_numbers = #tpu.dot_dimension_numbers<[1], [0], [0], [1], [0, 0, 1, 1], [], []>} : vector<8x512xf32>, vector<512x128xf32>, vector<8x128xf32> -> vector<8x128xf32>
      %c0_20 = arith.constant 0 : index
      %c0_21 = arith.constant 0 : index
      %21 = vector.load %arg6[%c0_20, %c0_21] : memref<1x128xf32, #tpu.memory_space<vmem>>, vector<1x128xf32>
      %22 = vector.broadcast %21 : vector<1x128xf32> to vector<8x128xf32>
      %23 = arith.addf %20, %22 : vector<8x128xf32>
      %24 = arith.mulf %23, %23 : vector<8x128xf32>
      %cst_22 = arith.constant dense<0.000000e+00> : vector<8xf32>
      %25 = vector.multi_reduction <add>, %24, %cst_22 [1] : vector<8x128xf32> to vector<8xf32>
      %26 = vector.shape_cast %25 : vector<8xf32> to vector<8x1xf32>
      %cst_23 = arith.constant 1.000000e-24 : f32
      %27 = vector.broadcast %cst_23 : f32 to vector<8x1xf32>
      %28 = arith.maximumf %26, %27 : vector<8x1xf32>
      %29 = math.rsqrt %28 : vector<8x1xf32>
      %30 = vector.broadcast %29 : vector<8x1xf32> to vector<8x128xf32>
      %31 = arith.mulf %23, %30 : vector<8x128xf32>
      %c0_24 = arith.constant 0 : index
      %c0_25 = arith.constant 0 : index
      %32 = vector.load %arg7[%c0_24, %c0_25] : memref<8x128xf32, #tpu.memory_space<vmem>>, vector<8x128xf32>
      tpu.vector_store %arg7[%c0_24, %c0_25], %31 {strides = array<i32>} : memref<8x128xf32, #tpu.memory_space<vmem>>, vector<8x128xf32>,
    } else {
    }
    return
  }
  func.func @transform_0(%arg0: i32, %arg1: i32) -> (i32, i32, i32) {
    %c0_i32 = arith.constant 0 : i32
    %c0_i32_0 = arith.constant 0 : i32
    return %arg0, %c0_i32, %arg1 : i32, i32, i32
  }
  func.func @transform_1(%arg0: i32, %arg1: i32) -> (i32, i32) {
    %c0_i32 = arith.constant 0 : i32
    %c0_i32_0 = arith.constant 0 : i32
    %c0_i32_1 = arith.constant 0 : i32
    return %c0_i32, %c0_i32_0 : i32, i32
  }
  func.func @transform_2(%arg0: i32, %arg1: i32) -> (i32, i32) {
    %c0_i32 = arith.constant 0 : i32
    %c0_i32_0 = arith.constant 0 : i32
    %c0_i32_1 = arith.constant 0 : i32
    return %c0_i32, %c0_i32_0 : i32, i32
  }
  func.func @transform_3(%arg0: i32, %arg1: i32) -> (i32, i32) {
    %c0_i32 = arith.constant 0 : i32
    %c0_i32_0 = arith.constant 0 : i32
    %c0_i32_1 = arith.constant 0 : i32
    return %c0_i32, %c0_i32_0 : i32, i32
  }
  func.func @transform_4(%arg0: i32, %arg1: i32) -> (i32, i32) {
    %c0_i32 = arith.constant 0 : i32
    %c0_i32_0 = arith.constant 0 : i32
    %c0_i32_1 = arith.constant 0 : i32
    return %c0_i32, %c0_i32_0 : i32, i32
  }
  func.func @transform_5(%arg0: i32, %arg1: i32) -> (i32, i32) {
    %c0_i32 = arith.constant 0 : i32
    %c0_i32_0 = arith.constant 0 : i32
    return %arg0, %c0_i32 : i32, i32
  }
}

</mosaic_0001>

<llo_original>
// kernel: memory_network_forward.1
$region0: #{memory_network_forward.1}
  #allocation0 [shape = 'u32[]', space=smem, size = 0x4, offset = 0x4, fixed_abs, tag = 'smem constant byte address 0x4 - core index']
  #allocation1 [shape = 'u32[144,128]{1,0:T(1,128)}', space=vmem, size = 0x12000, scoped, tag = 'internal scratch']
  #allocation2 [shape = 'f32[8,4]{1,0:T(8,128)}', space=vmem, size = 0x1000, scoped, tag = 'scratch operand']
  %s0 = inlined_call_operand.vmem [shape: f32[2,4,256], index: 0, kind: input, shape index: {}]
  %s1 = inlined_call_operand.vmem [shape: f32[4,512], index: 1, kind: input, shape index: {}]
  %s2 = inlined_call_operand.vmem [shape: f32[1,512], index: 2, kind: input, shape index: {}]
  %s3 = inlined_call_operand.hbm [shape: f32[512,128], index: 3, kind: input, shape index: {}]
  %s4 = inlined_call_operand.vmem [shape: f32[1,128], index: 4, kind: input, shape index: {}]
  %s5 = inlined_call_operand.vmem [shape: f32[8,128], index: 5, kind: output, shape index: {}]
  %s6 = sld [smem:[#allocation0]]
  $region42: #{memory_network_forward.1} parent=0
    _
  %s8 = ssub.s32 1, %s6
  %s9 = scalar_select 0, %s8, %s6
  $region1: #{memory_network_forward.1} parent=0
    #allocation3 [shape = 'u8[262144]{0}', space=vmem, size = 0x40000, scoped, tag = 'input window, operand 3, single buffered']
    #allocation4 [shape = 's32[1]{0}', space=sflag, size = 0x4, scoped, tag = 'scoped memory for memory_network_forward.1']
    %10 = vsyncpa [#allocation4], 0
    // Predicated region
    $region2: #{memory_network_forward.1} parent=1 // pred_check
      _
    $region3: #{memory_network_forward.1} parent=1 // pred_check_branch
      %12 = sbr.rel (0) target = $region5
    $region4: #{memory_network_forward.1} parent=1 // pred_region
      _
    $region5: #{memory_network_forward.1} parent=1 // pred_fallthru
      _
    // Predicated region
    $region6: #{memory_network_forward.1} parent=1 // pred_check
      _
    $region7: #{memory_network_forward.1} parent=1 // pred_check_branch
      %14 = sbr.rel (0) target = $region9
    $region8: #{memory_network_forward.1} parent=1 // pred_region
      _
    $region9: #{memory_network_forward.1} parent=1 // pred_fallthru
      _
    // Predicated region
    $region10: #{memory_network_forward.1} parent=1 // pred_check
      _
    $region11: #{memory_network_forward.1} parent=1 // pred_check_branch
      %16 = sbr.rel (0) target = $region13
    $region12: #{memory_network_forward.1} parent=1 // pred_region
      _
    $region13: #{memory_network_forward.1} parent=1 // pred_fallthru
      _
    // Predicated region
    $region14: #{memory_network_forward.1} parent=1 // pred_check
      _
    $region15: #{memory_network_forward.1} parent=1 // pred_check_branch
      %18 = sbr.rel (0) target = $region17
    $region16: #{memory_network_forward.1} parent=1 // pred_region
      %s20 = ssub.s32 8192, 8192
      %21 = vsyncadd [#allocation4], %s20
      %s22 = sshll.u32 [#allocation3], 4
      %s23 = int_to_ptr.vmem [resolvable:$true] %s22
      %28 = dma.hbm_to_vmem [thread:$0]  %s3, 8192, %s23, [#allocation4], 128, 128, 8
    $region17: #{memory_network_forward.1} parent=1 // pred_fallthru
      _
    // Predicated region
    $region18: #{memory_network_forward.1} parent=1 // pred_check
      _
    $region19: #{memory_network_forward.1} parent=1 // pred_check_branch
      %30 = sbr.rel (0) target = $region21
    $region20: #{memory_network_forward.1} parent=1 // pred_region
      _
    $region21: #{memory_network_forward.1} parent=1 // pred_fallthru
      _
    // Predicated region
    $region22: #{memory_network_forward.1} parent=1 // pred_check
      _
    $region23: #{memory_network_forward.1} parent=1 // pred_check_branch
      %32 = sbr.rel (0) target = $region25
    $region24: #{memory_network_forward.1} parent=1 // pred_region
      %33 = dma.done [#allocation4], 8192
    $region25: #{memory_network_forward.1} parent=1 // pred_fallthru
      _
    %p34 = scmp.eq.s32.totalorder 0, 0
    // Predicated region
    $region26: #{memory_network_forward.1} parent=1 // pred_check
      %p35 = pneg %p34
    $region27: #{memory_network_forward.1} parent=1 // pred_check_branch
      %37 = sbr.rel (%p35) target = $region29
    $region28: #{memory_network_forward.1} parent=1 // pred_region
      %vm38 = vcmask 31744
      %39 = vst.msk [vmem:[#allocation2] sm:$0xff] %vm38, 0.0
    $region29: #{memory_network_forward.1} parent=1 // pred_fallthru
      _
    %v40 = vld [vmem:[%s0] sm:$0xff]
    %v41 = vld [vmem:[%s0 + $0x8] sm:$0xff]
    %v42 = vld [vmem:[%s0 + $0x10] sm:$0xff]
    %v43 = vld [vmem:[%s0 + $0x18] sm:$0xff]
    %v44 = vld [vmem:[%s0 + $0x20] sm:$0xff]
    %v45 = vld [vmem:[%s0 + $0x28] sm:$0xff]
    %v46 = vld [vmem:[%s0 + $0x30] sm:$0xff]
    %v47 = vld [vmem:[%s0 + $0x38] sm:$0xff]
    %v48 = vld [vmem:[#allocation2] sm:$0xff]
    %v57 = vcombine.high %v40, %v40
    %v58 = vcombine.high %v41, %v41
    %v59 = vcombine.high %v42, %v42
    %v60 = vcombine.high %v43, %v43
    %v61 = vcombine.high %v44, %v44
    %v62 = vcombine.high %v45, %v45
    %v63 = vcombine.high %v46, %v46
    %v64 = vcombine.high %v47, %v47
    %vm73 = vcmask 1043456
    %v74 = vsel %vm73, %v40, 0.0
    %v75 = vsel %vm73, %v57, 0.0
    %v76 = vadd.f32 %v74, %v75
    %77 = vadd.xlane.f32.xlu0 %v76
    %v78 = vpop.xlane.xlu0 %77
    %v79 = vsel %vm73, %v41, 0.0
    %v80 = vsel %vm73, %v58, 0.0
    %v81 = vadd.f32 %v79, %v80
    %82 = vadd.xlane.f32.xlu0 %v81
    %v83 = vpop.xlane.xlu0 %82
    %v84 = vsel %vm73, %v42, 0.0
    %v85 = vsel %vm73, %v59, 0.0
    %v86 = vadd.f32 %v84, %v85
    %87 = vadd.xlane.f32.xlu0 %v86
    %v88 = vpop.xlane.xlu0 %87
    %v89 = vsel %vm73, %v43, 0.0
    %v90 = vsel %vm73, %v60, 0.0
    %v91 = vadd.f32 %v89, %v90
    %92 = vadd.xlane.f32.xlu0 %v91
    %v93 = vpop.xlane.xlu0 %92
    %v94 = vsel %vm73, %v44, 0.0
    %v95 = vsel %vm73, %v61, 0.0
    %v96 = vadd.f32 %v94, %v95
    %97 = vadd.xlane.f32.xlu0 %v96
    %v98 = vpop.xlane.xlu0 %97
    %v99 = vsel %vm73, %v45, 0.0
    %v100 = vsel %vm73, %v62, 0.0
    %v101 = vadd.f32 %v99, %v100
    %102 = vadd.xlane.f32.xlu0 %v101
    %v103 = vpop.xlane.xlu0 %102
    %v104 = vsel %vm73, %v46, 0.0
    %v105 = vsel %vm73, %v63, 0.0
    %v106 = vadd.f32 %v104, %v105
    %107 = vadd.xlane.f32.xlu0 %v106
    %v108 = vpop.xlane.xlu0 %107
    %v109 = vsel %vm73, %v47, 0.0
    %v110 = vsel %vm73, %v64, 0.0
    %v111 = vadd.f32 %v109, %v110
    %112 = vadd.xlane.f32.xlu0 %v111
    %v113 = vpop.xlane.xlu0 %112
    %v122 = vlaneseq
    %v123 = vand.u32 %v122, 127
    %v124 = vlaneseq
    %v125 = vshrl.u32 %v124, 7
    %v126 = vsub.s32 %v123, %v125
    %v127 = vrot.slane %v78, %v126
    %v128 = vlaneseq
    %v129 = vshrl.u32 %v128, 7
    %v130 = vsub.s32 %v123, %v129
    %v131 = vrot.slane %v83, %v130
    %v132 = vlaneseq
    %v133 = vshrl.u32 %v132, 7
    %v134 = vsub.s32 %v123, %v133
    %v135 = vrot.slane %v88, %v134
    %v136 = vlaneseq
    %v137 = vshrl.u32 %v136, 7
    %v138 = vsub.s32 %v123, %v137
    %v139 = vrot.slane %v93, %v138
    %v140 = vlaneseq
    %v141 = vshrl.u32 %v140, 7
    %v142 = vsub.s32 %v123, %v141
    %v143 = vrot.slane %v98, %v142
    %v144 = vlaneseq
    %v145 = vshrl.u32 %v144, 7
    %v146 = vsub.s32 %v123, %v145
    %v147 = vrot.slane %v103, %v146
    %v148 = vlaneseq
    %v149 = vshrl.u32 %v148, 7
    %v150 = vsub.s32 %v123, %v149
    %v151 = vrot.slane %v108, %v150
    %v152 = vlaneseq
    %v153 = vshrl.u32 %v152, 7
    %v154 = vsub.s32 %v123, %v153
    %v155 = vrot.slane %v113, %v154
    %vm156 = vcmask 1041409
    %v157 = vsel %vm156, %v131, %v127
    %vm158 = vcmask 1042434
    %v159 = vsel %vm158, %v135, %v157
    %vm160 = vcmask 1043459
    %v161 = vsel %vm160, %v139, %v159
    %vm162 = vcmask 1044484
    %v163 = vsel %vm162, %v143, %v161
    %vm164 = vcmask 1045509
    %v165 = vsel %vm164, %v147, %v163
    %vm166 = vcmask 1046534
    %v167 = vsel %vm166, %v151, %v165
    %vm168 = vcmask 1047559
    %v169 = vsel %vm168, %v155, %v167
    %v171 = vadd.f32 %v48, %v169
    %vm172 = vcmask 31744
    %173 = vst.msk [vmem:[#allocation2] sm:$0xff] %vm172, %v171
    // Predicated region
    $region30: #{memory_network_forward.1} parent=1 // pred_check
      %p174 = pneg %p34
    $region31: #{memory_network_forward.1} parent=1 // pred_check_branch
      %176 = sbr.rel (%p174) target = $region33
    $region32: #{memory_network_forward.1} parent=1 // pred_region
      %v177 = vld [vmem:[#allocation2] sm:$0xff]
      %v178 = vld [vmem:[%s1] sm:$0xff]
      %v179 = vld [vmem:[%s1 + $0x8] sm:$0xff]
      %v180 = vld [vmem:[%s2] sm:$0xf]
      %v182 = vlaneseq
      %v183 = vshrl.u32 %v182, 7
      %v184 = vsub.s32 0, %v183
      %v185 = vrot.slane %v180, %v184
      %v186 = vlaneseq
      %v187 = vshrl.u32 %v186, 7
      %v188 = vsub.s32 1, %v187
      %v189 = vrot.slane %v180, %v188
      %v190 = vlaneseq
      %v191 = vshrl.u32 %v190, 7
      %v192 = vsub.s32 2, %v191
      %v193 = vrot.slane %v180, %v192
      %v194 = vlaneseq
      %v195 = vshrl.u32 %v194, 7
      %v196 = vsub.s32 3, %v195
      %v197 = vrot.slane %v180, %v196
      %v204 = vcombine.high %v178, %v178
      %v205 = vcombine.high %v179, %v179
      %v207 = vsel %vm172, %v177, 0
      %v209 = vsel %vm73, %v178, 0
      %v211 = vsel %vm73, %v204, 0
      %v213 = vsel %vm73, %v179, 0
      %v215 = vsel %vm73, %v205, 0
      %217 = vmatprep.subr.mxu0 %v211
      %218 = vmatpush1.msra.mxu0 %v209
      %219 = vmatprep.subr.mxu0 0.0
      %220 = vmatpush1.msra.mxu0 0.0
      %221 = vmatprep.subr.mxu0 0.0
      %222 = vmatpush1.msra.mxu0 0.0
      %223 = vmatprep.subr.mxu0 0.0
      %224 = vmatpush1.msra.mxu0 0.0
      %225 = vmatprep.subr.mxu0 0.0
      %226 = vmatpush1.msra.mxu0 0.0
      %227 = vmatprep.subr.mxu0 0.0
      %228 = vmatpush1.msra.mxu0 0.0
      %229 = vmatprep.subr.mxu0 0.0
      %230 = vmatpush1.msra.mxu0 0.0
      %231 = vmatprep.subr.mxu0 0.0
      %232 = vmatpush1.msra.mxu0 0.0
      %233 = vmatprep.subr.mxu0 0.0
      %234 = vmatpush1.msra.mxu0 0.0
      %235 = vmatprep.subr.mxu0 0.0
      %236 = vmatpush1.msra.mxu0 0.0
      %237 = vmatprep.subr.mxu0 0.0
      %238 = vmatpush1.msra.mxu0 0.0
      %239 = vmatprep.subr.mxu0 0.0
      %240 = vmatpush1.msra.mxu0 0.0
      %241 = vmatprep.subr.mxu0 0.0
      %242 = vmatpush1.msra.mxu0 0.0
      %243 = vmatprep.subr.mxu0 0.0
      %244 = vmatpush1.msra.mxu0 0.0
      %245 = vmatprep.subr.mxu0 0.0
      %246 = vmatpush1.msra.mxu0 0.0
      %247 = vmatprep.subr.mxu0 0.0
      %248 = vmatpush1.msra.mxu0 0.0
      %249 = vmatprep.subr.mxu0 0.0
      %250 = vmatpush1.msra.mxu0 0.0
      %251 = vmatprep.subr.mxu0 0.0
      %252 = vmatpush1.msra.mxu0 0.0
      %253 = vmatprep.subr.mxu0 0.0
      %254 = vmatpush1.msra.mxu0 0.0
      %255 = vmatprep.subr.mxu0 0.0
      %256 = vmatpush1.msra.mxu0 0.0
      %257 = vmatprep.subr.mxu0 0.0
      %258 = vmatpush1.msra.mxu0 0.0
      %259 = vmatprep.subr.mxu0 0.0
      %260 = vmatpush1.msra.mxu0 0.0
      %261 = vmatprep.subr.mxu0 0.0
      %262 = vmatpush1.msra.mxu0 0.0
      %263 = vmatprep.subr.mxu0 0.0
      %264 = vmatpush1.msra.mxu0 0.0
      %265 = vmatprep.subr.mxu0 0.0
      %266 = vmatpush1.msra.mxu0 0.0
      %267 = vmatprep.subr.mxu0 0.0
      %268 = vmatpush1.msra.mxu0 0.0
      %269 = vmatprep.subr.mxu0 0.0
      %270 = vmatpush1.msra.mxu0 0.0
      %271 = vmatprep.subr.mxu0 0.0
      %272 = vmatpush1.msra.mxu0 0.0
      %273 = vmatprep.subr.mxu0 0.0
      %274 = vmatpush1.msra.mxu0 0.0
      %275 = vmatprep.subr.mxu0 0.0
      %276 = vmatpush1.msra.mxu0 0.0
      %277 = vmatprep.subr.mxu0 0.0
      %278 = vmatpush1.msra.mxu0 0.0
      %279 = vmatprep.subr.mxu0 0.0
      %280 = vmatpush1.msra.mxu0 0.0
      %281 = vmatprep.mubr.f32.mxu0 0.0
      %282 = vmatmul.mubr.f32.gmra.mrb[0].mxu0 %v207
      %v283 = vpop.f32.mrb[0].mxu0
      %v284 = vadd.f32 %v185, %v283
      %v285 = vpop.f32.mrb[0].mxu0
      %v286 = vadd.f32 %v189, %v285
      %287 = vdwg.mxu0
      %288 = vmatprep.subr.mxu0 %v215
      %289 = vmatpush1.msra.mxu0 %v213
      %290 = vmatprep.subr.mxu0 0.0
      %291 = vmatpush1.msra.mxu0 0.0
      %292 = vmatprep.subr.mxu0 0.0
      %293 = vmatpush1.msra.mxu0 0.0
      %294 = vmatprep.subr.mxu0 0.0
      %295 = vmatpush1.msra.mxu0 0.0
      %296 = vmatprep.subr.mxu0 0.0
      %297 = vmatpush1.msra.mxu0 0.0
      %298 = vmatprep.subr.mxu0 0.0
      %299 = vmatpush1.msra.mxu0 0.0
      %300 = vmatprep.subr.mxu0 0.0
      %301 = vmatpush1.msra.mxu0 0.0
      %302 = vmatprep.subr.mxu0 0.0
      %303 = vmatpush1.msra.mxu0 0.0
      %304 = vmatprep.subr.mxu0 0.0
      %305 = vmatpush1.msra.mxu0 0.0
      %306 = vmatprep.subr.mxu0 0.0
      %307 = vmatpush1.msra.mxu0 0.0
      %308 = vmatprep.subr.mxu0 0.0
      %309 = vmatpush1.msra.mxu0 0.0
      %310 = vmatprep.subr.mxu0 0.0
      %311 = vmatpush1.msra.mxu0 0.0
      %312 = vmatprep.subr.mxu0 0.0
      %313 = vmatpush1.msra.mxu0 0.0
      %314 = vmatprep.subr.mxu0 0.0
      %315 = vmatpush1.msra.mxu0 0.0
      %316 = vmatprep.subr.mxu0 0.0
      %317 = vmatpush1.msra.mxu0 0.0
      %318 = vmatprep.subr.mxu0 0.0
      %319 = vmatpush1.msra.mxu0 0.0
      %320 = vmatprep.subr.mxu0 0.0
      %321 = vmatpush1.msra.mxu0 0.0
      %322 = vmatprep.subr.mxu0 0.0
      %323 = vmatpush1.msra.mxu0 0.0
      %324 = vmatprep.subr.mxu0 0.0
      %325 = vmatpush1.msra.mxu0 0.0
      %326 = vmatprep.subr.mxu0 0.0
      %327 = vmatpush1.msra.mxu0 0.0
      %328 = vmatprep.subr.mxu0 0.0
      %329 = vmatpush1.msra.mxu0 0.0
      %330 = vmatprep.subr.mxu0 0.0
      %331 = vmatpush1.msra.mxu0 0.0
      %332 = vmatprep.subr.mxu0 0.0
      %333 = vmatpush1.msra.mxu0 0.0
      %334 = vmatprep.subr.mxu0 0.0
      %335 = vmatpush1.msra.mxu0 0.0
      %336 = vmatprep.subr.mxu0 0.0
      %337 = vmatpush1.msra.mxu0 0.0
      %338 = vmatprep.subr.mxu0 0.0
      %339 = vmatpush1.msra.mxu0 0.0
      %340 = vmatprep.subr.mxu0 0.0
      %341 = vmatpush1.msra.mxu0 0.0
      %342 = vmatprep.subr.mxu0 0.0
      %343 = vmatpush1.msra.mxu0 0.0
      %344 = vmatprep.subr.mxu0 0.0
      %345 = vmatpush1.msra.mxu0 0.0
      %346 = vmatprep.subr.mxu0 0.0
      %347 = vmatpush1.msra.mxu0 0.0
      %348 = vmatprep.subr.mxu0 0.0
      %349 = vmatpush1.msra.mxu0 0.0
      %350 = vmatprep.subr.mxu0 0.0
      %351 = vmatpush1.msra.mxu0 0.0
      %352 = vmatprep.mubr.f32.mxu0 0.0
      %353 = vmatmul.mubr.f32.gmra.mrb[0].mxu0 %v207
      %v354 = vpop.f32.mrb[0].mxu0
      %v355 = vadd.f32 %v193, %v354
      %v356 = vpop.f32.mrb[0].mxu0
      %v357 = vadd.f32 %v197, %v356
      %358 = vdwg.mxu0
      %v359 = vmax.f32 %v284, 0.0
      %v360 = vmax.f32 %v286, 0.0
      %v361 = vmax.f32 %v355, 0.0
      %v362 = vmax.f32 %v357, 0.0
      %v363 = vld [vmem:[#allocation3] sm:$0xff]
      %v364 = vld [vmem:[#allocation3 + $0x8] sm:$0xff]
      %v365 = vld [vmem:[#allocation3 + $0x10] sm:$0xff]
      %v366 = vld [vmem:[#allocation3 + $0x18] sm:$0xff]
      %v367 = vld [vmem:[#allocation3 + $0x20] sm:$0xff]
      %v368 = vld [vmem:[#allocation3 + $0x28] sm:$0xff]
      %v369 = vld [vmem:[#allocation3 + $0x30] sm:$0xff]
      %v370 = vld [vmem:[#allocation3 + $0x38] sm:$0xff]
      %v371 = vld [vmem:[#allocation3 + $0x40] sm:$0xff]
      %v372 = vld [vmem:[#allocation3 + $0x48] sm:$0xff]
      %v373 = vld [vmem:[#allocation3 + $0x50] sm:$0xff]
      %v374 = vld [vmem:[#allocation3 + $0x58] sm:$0xff]
      %v375 = vld [vmem:[#allocation3 + $0x60] sm:$0xff]
      %v376 = vld [vmem:[#allocation3 + $0x68] sm:$0xff]
      %v377 = vld [vmem:[#allocation3 + $0x70] sm:$0xff]
      %v378 = vld [vmem:[#allocation3 + $0x78] sm:$0xff]
      %v379 = vld [vmem:[#allocation3 + $0x80] sm:$0xff]
      %v380 = vld [vmem:[#allocation3 + $0x88] sm:$0xff]
      %v381 = vld [vmem:[#allocation3 + $0x90] sm:$0xff]
      %v382 = vld [vmem:[#allocation3 + $0x98] sm:$0xff]
      %v383 = vld [vmem:[#allocation3 + $0xa0] sm:$0xff]
      %v384 = vld [vmem:[#allocation3 + $0xa8] sm:$0xff]
      %v385 = vld [vmem:[#allocation3 + $0xb0] sm:$0xff]
      %v386 = vld [vmem:[#allocation3 + $0xb8] sm:$0xff]
      %v387 = vld [vmem:[#allocation3 + $0xc0] sm:$0xff]
      %v388 = vld [vmem:[#allocation3 + $0xc8] sm:$0xff]
      %v389 = vld [vmem:[#allocation3 + $0xd0] sm:$0xff]
      %v390 = vld [vmem:[#allocation3 + $0xd8] sm:$0xff]
      %v391 = vld [vmem:[#allocation3 + $0xe0] sm:$0xff]
      %v392 = vld [vmem:[#allocation3 + $0xe8] sm:$0xff]
      %v393 = vld [vmem:[#allocation3 + $0xf0] sm:$0xff]
      %v394 = vld [vmem:[#allocation3 + $0xf8] sm:$0xff]
      %v395 = vld [vmem:[#allocation3 + $0x100] sm:$0xff]
      %v396 = vld [vmem:[#allocation3 + $0x108] sm:$0xff]
      %v397 = vld [vmem:[#allocation3 + $0x110] sm:$0xff]
      %v398 = vld [vmem:[#allocation3 + $0x118] sm:$0xff]
      %v399 = vld [vmem:[#allocation3 + $0x120] sm:$0xff]
      %v400 = vld [vmem:[#allocation3 + $0x128] sm:$0xff]
      %v401 = vld [vmem:[#allocation3 + $0x130] sm:$0xff]
      %v402 = vld [vmem:[#allocation3 + $0x138] sm:$0xff]
      %v403 = vld [vmem:[#allocation3 + $0x140] sm:$0xff]
      %v404 = vld [vmem:[#allocation3 + $0x148] sm:$0xff]
      %v405 = vld [vmem:[#allocation3 + $0x150] sm:$0xff]
      %v406 = vld [vmem:[#allocation3 + $0x158] sm:$0xff]
      %v407 = vld [vmem:[#allocation3 + $0x160] sm:$0xff]
      %v408 = vld [vmem:[#allocation3 + $0x168] sm:$0xff]
      %v409 = vld [vmem:[#allocation3 + $0x170] sm:$0xff]
      %v410 = vld [vmem:[#allocation3 + $0x178] sm:$0xff]
      %v411 = vld [vmem:[#allocation3 + $0x180] sm:$0xff]
      %v412 = vld [vmem:[#allocation3 + $0x188] sm:$0xff]
      %v413 = vld [vmem:[#allocation3 + $0x190] sm:$0xff]
      %v414 = vld [vmem:[#allocation3 + $0x198] sm:$0xff]
      %v415 = vld [vmem:[#allocation3 + $0x1a0] sm:$0xff]
      %v416 = vld [vmem:[#allocation3 + $0x1a8] sm:$0xff]
      %v417 = vld [vmem:[#allocation3 + $0x1b0] sm:$0xff]
      %v418 = vld [vmem:[#allocation3 + $0x1b8] sm:$0xff]
      %v419 = vld [vmem:[#allocation3 + $0x1c0] sm:$0xff]
      %v420 = vld [vmem:[#allocation3 + $0x1c8] sm:$0xff]
      %v421 = vld [vmem:[#allocation3 + $0x1d0] sm:$0xff]
      %v422 = vld [vmem:[#allocation3 + $0x1d8] sm:$0xff]
      %v423 = vld [vmem:[#allocation3 + $0x1e0] sm:$0xff]
      %v424 = vld [vmem:[#allocation3 + $0x1e8] sm:$0xff]
      %v425 = vld [vmem:[#allocation3 + $0x1f0] sm:$0xff]
      %v426 = vld [vmem:[#allocation3 + $0x1f8] sm:$0xff]
      %v427 = vld [vmem:[%s4] sm:$0x1]
      %v429 = vlaneseq
      %v430 = vshrl.u32 %v429, 7
      %v431 = vsub.s32 0, %v430
      %v432 = vrot.slane %v427, %v431
      %434 = vmatprep.subr.mxu0 0.0
      %435 = vmatpush1.msra.mxu0 %v363
      %436 = vmatprep.subr.mxu0 0.0
      %437 = vmatpush1.msra.mxu0 %v364
      %438 = vmatprep.subr.mxu0 0.0
      %439 = vmatpush1.msra.mxu0 %v365
      %440 = vmatprep.subr.mxu0 0.0
      %441 = vmatpush1.msra.mxu0 %v366
      %442 = vmatprep.subr.mxu0 0.0
      %443 = vmatpush1.msra.mxu0 %v367
      %444 = vmatprep.subr.mxu0 0.0
      %445 = vmatpush1.msra.mxu0 %v368
      %446 = vmatprep.subr.mxu0 0.0
      %447 = vmatpush1.msra.mxu0 %v369
      %448 = vmatprep.subr.mxu0 0.0
      %449 = vmatpush1.msra.mxu0 %v370
      %450 = vmatprep.subr.mxu0 0.0
      %451 = vmatpush1.msra.mxu0 %v371
      %452 = vmatprep.subr.mxu0 0.0
      %453 = vmatpush1.msra.mxu0 %v372
      %454 = vmatprep.subr.mxu0 0.0
      %455 = vmatpush1.msra.mxu0 %v373
      %456 = vmatprep.subr.mxu0 0.0
      %457 = vmatpush1.msra.mxu0 %v374
      %458 = vmatprep.subr.mxu0 0.0
      %459 = vmatpush1.msra.mxu0 %v375
      %460 = vmatprep.subr.mxu0 0.0
      %461 = vmatpush1.msra.mxu0 %v376
      %462 = vmatprep.subr.mxu0 0.0
      %463 = vmatpush1.msra.mxu0 %v377
      %464 = vmatprep.subr.mxu0 0.0
      %465 = vmatpush1.msra.mxu0 %v378
      %466 = vmatprep.subr.mxu0 0.0
      %467 = vmatpush1.msra.mxu0 %v379
      %468 = vmatprep.subr.mxu0 0.0
      %469 = vmatpush1.msra.mxu0 %v380
      %470 = vmatprep.subr.mxu0 0.0
      %471 = vmatpush1.msra.mxu0 %v381
      %472 = vmatprep.subr.mxu0 0.0
      %473 = vmatpush1.msra.mxu0 %v382
      %474 = vmatprep.subr.mxu0 0.0
      %475 = vmatpush1.msra.mxu0 %v383
      %476 = vmatprep.subr.mxu0 0.0
      %477 = vmatpush1.msra.mxu0 %v384
      %478 = vmatprep.subr.mxu0 0.0
      %479 = vmatpush1.msra.mxu0 %v385
      %480 = vmatprep.subr.mxu0 0.0
      %481 = vmatpush1.msra.mxu0 %v386
      %482 = vmatprep.subr.mxu0 0.0
      %483 = vmatpush1.msra.mxu0 %v387
      %484 = vmatprep.subr.mxu0 0.0
      %485 = vmatpush1.msra.mxu0 %v388
      %486 = vmatprep.subr.mxu0 0.0
      %487 = vmatpush1.msra.mxu0 %v389
      %488 = vmatprep.subr.mxu0 0.0
      %489 = vmatpush1.msra.mxu0 %v390
      %490 = vmatprep.subr.mxu0 0.0
      %491 = vmatpush1.msra.mxu0 %v391
      %492 = vmatprep.subr.mxu0 0.0
      %493 = vmatpush1.msra.mxu0 %v392
      %494 = vmatprep.subr.mxu0 0.0
      %495 = vmatpush1.msra.mxu0 %v393
      %496 = vmatprep.subr.mxu0 0.0
      %497 = vmatpush1.msra.mxu0 %v394
      %498 = vmatprep.mubr.f32.mxu0 %v360
      %499 = vmatmul.mubr.f32.gmra.mrb[0].mxu0 %v359
      %v500 = vpop.f32.mrb[0].mxu0
      %v501 = vadd.f32 %v432, %v500
      %v502 = vpop.f32.mrb[0].mxu0
      %503 = vdwg.mxu0
      %504 = vmatprep.subr.mxu0 0.0
      %505 = vmatpush1.msra.mxu0 %v395
      %506 = vmatprep.subr.mxu0 0.0
      %507 = vmatpush1.msra.mxu0 %v396
      %508 = vmatprep.subr.mxu0 0.0
      %509 = vmatpush1.msra.mxu0 %v397
      %510 = vmatprep.subr.mxu0 0.0
      %511 = vmatpush1.msra.mxu0 %v398
      %512 = vmatprep.subr.mxu0 0.0
      %513 = vmatpush1.msra.mxu0 %v399
      %514 = vmatprep.subr.mxu0 0.0
      %515 = vmatpush1.msra.mxu0 %v400
      %516 = vmatprep.subr.mxu0 0.0
      %517 = vmatpush1.msra.mxu0 %v401
      %518 = vmatprep.subr.mxu0 0.0
      %519 = vmatpush1.msra.mxu0 %v402
      %520 = vmatprep.subr.mxu0 0.0
      %521 = vmatpush1.msra.mxu0 %v403
      %522 = vmatprep.subr.mxu0 0.0
      %523 = vmatpush1.msra.mxu0 %v404
      %524 = vmatprep.subr.mxu0 0.0
      %525 = vmatpush1.msra.mxu0 %v405
      %526 = vmatprep.subr.mxu0 0.0
      %527 = vmatpush1.msra.mxu0 %v406
      %528 = vmatprep.subr.mxu0 0.0
      %529 = vmatpush1.msra.mxu0 %v407
      %530 = vmatprep.subr.mxu0 0.0
      %531 = vmatpush1.msra.mxu0 %v408
      %532 = vmatprep.subr.mxu0 0.0
      %533 = vmatpush1.msra.mxu0 %v409
      %534 = vmatprep.subr.mxu0 0.0
      %535 = vmatpush1.msra.mxu0 %v410
      %536 = vmatprep.subr.mxu0 0.0
      %537 = vmatpush1.msra.mxu0 %v411
      %538 = vmatprep.subr.mxu0 0.0
      %539 = vmatpush1.msra.mxu0 %v412
      %540 = vmatprep.subr.mxu0 0.0
      %541 = vmatpush1.msra.mxu0 %v413
      %542 = vmatprep.subr.mxu0 0.0
      %543 = vmatpush1.msra.mxu0 %v414
      %544 = vmatprep.subr.mxu0 0.0
      %545 = vmatpush1.msra.mxu0 %v415
      %546 = vmatprep.subr.mxu0 0.0
      %547 = vmatpush1.msra.mxu0 %v416
      %548 = vmatprep.subr.mxu0 0.0
      %549 = vmatpush1.msra.mxu0 %v417
      %550 = vmatprep.subr.mxu0 0.0
      %551 = vmatpush1.msra.mxu0 %v418
      %552 = vmatprep.subr.mxu0 0.0
      %553 = vmatpush1.msra.mxu0 %v419
      %554 = vmatprep.subr.mxu0 0.0
      %555 = vmatpush1.msra.mxu0 %v420
      %556 = vmatprep.subr.mxu0 0.0
      %557 = vmatpush1.msra.mxu0 %v421
      %558 = vmatprep.subr.mxu0 0.0
      %559 = vmatpush1.msra.mxu0 %v422
      %560 = vmatprep.subr.mxu0 0.0
      %561 = vmatpush1.msra.mxu0 %v423
      %562 = vmatprep.subr.mxu0 0.0
      %563 = vmatpush1.msra.mxu0 %v424
      %564 = vmatprep.subr.mxu0 0.0
      %565 = vmatpush1.msra.mxu0 %v425
      %566 = vmatprep.subr.mxu0 0.0
      %567 = vmatpush1.msra.mxu0 %v426
      %568 = vmatprep.mubr.f32.mxu0 %v362
      %569 = vmatmul.mubr.f32.gmra.mrb[0].mxu0 %v361
      %v570 = vpop.f32.mrb[0].mxu0
      %v571 = vadd.f32 %v501, %v570
      %v572 = vpop.f32.mrb[0].mxu0
      %573 = vdwg.mxu0
      %v574 = vmul.f32 %v571, %v571
      %575 = vadd.xlane.f32.xlu0 %v574
      %v576 = vpop.xlane.xlu0 %575
      %v577 = vmax.f32 %v576, 1e-24
      %v578 = vrsqrt.pop %v577
      %v579 = vmul.f32 %v571, %v578
      %580 = vst [vmem:[%s5] sm:$0xff] %v579
    $region33: #{memory_network_forward.1} parent=1 // pred_fallthru
      _
    // Predicated region
    $region34: #{memory_network_forward.1} parent=1 // pred_check
      _
    $region35: #{memory_network_forward.1} parent=1 // pred_check_branch
      %582 = sbr.rel (0) target = $region37
    $region36: #{memory_network_forward.1} parent=1 // pred_region
      _
    $region37: #{memory_network_forward.1} parent=1 // pred_fallthru
      _
    // Predicated region
    $region38: #{memory_network_forward.1} parent=1 // pred_check
      _
    $region39: #{memory_network_forward.1} parent=1 // pred_check_branch
      %584 = sbr.rel (0) target = $region41
    $region40: #{memory_network_forward.1} parent=1 // pred_region
      _
    $region41: #{memory_network_forward.1} parent=1 // pred_fallthru
      _
    %585 = vsyncpa [#allocation4], 1

</llo_original>
